<compile_context>
chip_gen: v6e
topology: v6e:2x2x1
jax: 0.10.0
libtpu: 0.0.40
codegen_flags: <defaults>
</compile_context>

<pallas_src>
import functools

import jax
import jax.numpy as jnp
from jax.experimental import pallas as pl
from jax.experimental.pallas import tpu as pltpu


def _round_up(x, m):
    return (x + m - 1) // m * m


def _largest_block(n, unit, cap):
    """Largest multiple of `unit` that divides n and is <= cap (>= unit)."""
    best = unit
    d = unit
    lim = min(n, cap)
    while d <= lim:
        if n % d == 0:
            best = d
        d += unit
    return best


def _choose_tiling(B, Ci, Co_pad, M2, mode_tile):
    """Pick (tm, co_blk, vmem_limit) that fit the current chip's VMEM."""
    try:
        vmem_cap = int(pltpu.get_tpu_info().vmem_capacity_bytes)
    except Exception:
        vmem_cap = 64 * 1024 * 1024            # conservative (v7x per-TC)
    budget = vmem_cap // 2                     # headroom for double-buffering etc.

    # Lane tile: multiple of 128; prefer >= 2 mode tiles so v7x can use both TCs.
    n128 = _round_up(M2, 128) // 128
    max_tm_tiles = max(1, (n128 + 1) // 2) if n128 >= 2 else 1
    tm_tiles = max(1, min(max(mode_tile, 128) // 128, max_tm_tiles))
    tm = 128 * tm_tiles

    # Co grid block: multiple of 8 dividing Co_pad.
    co_blk = _largest_block(Co_pad, 8, 64)

    def tile_bytes(tm_, co_):
        return 4 * tm_ * (2 * B * Ci + 2 * Ci * co_ + 2 * B * co_)

    # Shrink tm, then co_blk, until the double-buffered footprint fits.
    while 3 * tile_bytes(tm, co_blk) > budget and (tm > 128 or co_blk > 8):
        if tm > 128:
            tm = 128 * max(1, (tm // 128) // 2)
        else:
            co_blk = _largest_block(Co_pad, 8, max(8, co_blk // 2))
            if co_blk <= 8:
                break

    vlim = int(min(max(16 * 1024 * 1024, 3 * tile_bytes(tm, co_blk) + (2 << 20)),
                   int(vmem_cap * 0.9)))
    return tm, co_blk, vlim


def _spectral_mul_kernel(x_ref, w_ref, o_ref, *, co_t):
    """out[b,o,m] = sum_i x[b,i,m] * w[i,o,m]   (complex; re/im on axis 0).

    Per grid step (one lane-dense mode tile TM, one Co block co_blk):
      x_ref: (2, B, Ci, TM)   w_ref: (2, Ci, co_blk, TM)   o_ref: (2, B, co_blk, TM)
    """
    _, B, Ci, tm = x_ref.shape
    co_blk = w_ref.shape[2]
    n_ct = co_blk // co_t

    for b in range(B):                      # small static batch loop
        for ct in range(n_ct):              # Co tiled so the acc stays tiny
            c0 = ct * co_t

            def body(i, carry, b=b, c0=c0):
                acc_r, acc_i = carry
                # Singleton-preserving slices; broadcast each x row once.
                xr = jnp.broadcast_to(
                    x_ref[0, pl.ds(b, 1), pl.ds(i, 1), :], (1, co_t, tm))
                xi = jnp.broadcast_to(
                    x_ref[1, pl.ds(b, 1), pl.ds(i, 1), :], (1, co_t, tm))
                wr = w_ref[0, pl.ds(i, 1), pl.ds(c0, co_t), :]   # (1, co_t, TM)
                wi = w_ref[1, pl.ds(i, 1), pl.ds(c0, co_t), :]
                # (a + ib)(c + id) = (ac - bd) + i(ad + bc)
                acc_r = acc_r + xr * wr - xi * wi
                acc_i = acc_i + xr * wi + xi * wr
                return acc_r, acc_i

            zeros = jnp.zeros((1, co_t, tm), jnp.float32)
            if Ci <= 8:
                carry = (zeros, zeros)
                for i in range(Ci):
                    carry = body(i, carry)
                acc_r, acc_i = carry
            else:
                acc_r, acc_i = jax.lax.fori_loop(
                    0, Ci, body, (zeros, zeros), unroll=4)

            o_ref[0, pl.ds(b, 1), pl.ds(c0, co_t), :] = acc_r
            o_ref[1, pl.ds(b, 1), pl.ds(c0, co_t), :] = acc_i


def _spectral_mul(x_pk, w_pk, *, co_blk, co_t, tm, vmem_limit):
    """Pallas wrapper: packed re/im, lane-/sublane-padded channel contraction.

    x_pk: (2, B, Ci, M_pad) f32     w_pk: (2, Ci, Co_pad, M_pad) f32
    returns out_pk: (2, B, Co_pad, M_pad) f32
    """
    _, B, Ci, m_pad = x_pk.shape
    Co_pad = w_pk.shape[2]
    assert m_pad % tm == 0 and tm % 128 == 0
    assert Co_pad % co_blk == 0 and co_blk % co_t == 0

    grid = (m_pad // tm, Co_pad // co_blk)

    # NOTE: if profiling shows exposed DMA at small Ci/Co, sweep
    # pipeline_mode=pl.Buffered(3) on the input BlockSpecs.
    return pl.pallas_call(
        functools.partial(_spectral_mul_kernel, co_t=co_t),
        grid=grid,
        in_specs=[
            # x is constant over the Co-block axis (fastest) -> fetched once.
            pl.BlockSpec((2, B, Ci, tm), lambda m, c: (0, 0, 0, m)),
            pl.BlockSpec((2, Ci, co_blk, tm), lambda m, c: (0, 0, c, m)),
        ],
        out_specs=pl.BlockSpec((2, B, co_blk, tm), lambda m, c: (0, 0, c, m)),
        out_shape=jax.ShapeDtypeStruct((2, B, Co_pad, m_pad), jnp.float32),
        compiler_params=pltpu.CompilerParams(
            dimension_semantics=("parallel", "parallel"),
            vmem_limit_bytes=vmem_limit,
        ),
    )(x_pk, w_pk)


def spectral_conv2d(x, w1, w2, modes1, modes2, mode_tile=512):
    """Forward pass of SpectralConv2d.

    x: (B, C_in, H, W) float32
    w1, w2: (C_in, C_out, modes1, modes2) complex64
    returns (B, C_out, H, W) float32
    """
    B, Ci, H, W = x.shape
    Co = w1.shape[1]
    M = modes1 * modes2
    M2 = 2 * M                                  # both corners fused on one mode axis
    Co_pad = _round_up(Co, 8)                   # sublane-dense w / out blocks

    tm, co_blk, vlim = _choose_tiling(B, Ci, Co_pad, M2, mode_tile)
    co_t = _largest_block(co_blk, 8, max(8, 8192 // tm))   # acc tile <= ~16 vregs
    m_pad = _round_up(M2, tm)

    # TODO(synk): rfft2/irfft2 have no Pallas primitive on TPU; they stay in XLA.
    x_ft = jnp.fft.rfft2(x)                     # (B, Ci, H, W//2 + 1) complex64

    c1 = x_ft[:, :, :modes1, :modes2].reshape(B, Ci, M)
    c2 = x_ft[:, :, H - modes1:, :modes2].reshape(B, Ci, M)
    x_fused = jnp.concatenate([c1, c2], axis=-1)                     # (B, Ci, 2M)
    w_fused = jnp.concatenate([w1.reshape(Ci, Co, M),
                               w2.reshape(Ci, Co, M)], axis=-1)      # (Ci, Co, 2M)

    # Pack re/im on a leading size-2 axis; zero-pad modes (lanes) and Co (sublanes).
    x_pk = jnp.stack([jnp.real(x_fused), jnp.imag(x_fused)]).astype(jnp.float32)
    w_pk = jnp.stack([jnp.real(w_fused), jnp.imag(w_fused)]).astype(jnp.float32)
    x_pk = jnp.pad(x_pk, ((0, 0), (0, 0), (0, 0), (0, m_pad - M2)))
    w_pk = jnp.pad(w_pk, ((0, 0), (0, 0), (0, Co_pad - Co), (0, m_pad - M2)))

    out_pk = _spectral_mul(x_pk, w_pk, co_blk=co_blk, co_t=co_t,
                           tm=tm, vmem_limit=vlim)        # (2, B, Co_pad, m_pad)

    out_c = (out_pk[0, :, :Co, :M2]
             + 1j * out_pk[1, :, :Co, :M2]).astype(jnp.complex64)    # (B, Co, 2M)
    o1 = out_c[..., :M].reshape(B, Co, modes1, modes2)
    o2 = out_c[..., M:].reshape(B, Co, modes1, modes2)

    out_ft = jnp.zeros((B, Co, H, W // 2 + 1), dtype=jnp.complex64)
    out_ft = out_ft.at[:, :, :modes1, :modes2].set(o1)
    out_ft = out_ft.at[:, :, H - modes1:, :modes2].set(o2)

    return jnp.fft.irfft2(out_ft, s=(H, W))


def reference_spectral_conv2d(x, w1, w2, modes1, modes2):
    """Pure-JAX reference (mirrors the PyTorch forward exactly)."""
    B, Ci, H, W = x.shape
    Co = w1.shape[1]
    x_ft = jnp.fft.rfft2(x)
    out_ft = jnp.zeros((B, Co, H, W // 2 + 1), dtype=jnp.complex64)
    out_ft = out_ft.at[:, :, :modes1, :modes2].set(
        jnp.einsum("bixy,ioxy->boxy", x_ft[:, :, :modes1, :modes2], w1))
    out_ft = out_ft.at[:, :, H - modes1:, :modes2].set(
        jnp.einsum("bixy,ioxy->boxy", x_ft[:, :, H - modes1:, :modes2], w2))
    return jnp.fft.irfft2(out_ft, s=(H, W))


if __name__ == "__main__":
    B, Ci, Co = 2, 4, 4
    H = W = 16
    modes1 = modes2 = 4

    key = jax.random.PRNGKey(0)
    kx, kw1r, kw1i, kw2r, kw2i = jax.random.split(key, 5)

    x = jax.random.normal(kx, (B, Ci, H, W), dtype=jnp.float32)

    # weights = scale * torch.rand(..., dtype=cfloat): real/imag ~ U[0,1)
    scale = 1.0 / (Ci * Co)
    w1 = (scale * (jax.random.uniform(kw1r, (Ci, Co, modes1, modes2))
                   + 1j * jax.random.uniform(kw1i, (Ci, Co, modes1, modes2)))
          ).astype(jnp.complex64)
    w2 = (scale * (jax.random.uniform(kw2r, (Ci, Co, modes1, modes2))
                   + 1j * jax.random.uniform(kw2i, (Ci, Co, modes1, modes2)))
          ).astype(jnp.complex64)

    fwd = jax.jit(spectral_conv2d, static_argnums=(3, 4, 5))
    out = jax.block_until_ready(fwd(x, w1, w2, modes1, modes2, 512))

    ref = jax.block_until_ready(
        reference_spectral_conv2d(x, w1, w2, modes1, modes2))

    assert out.shape == (B, Co, H, W)
    assert jnp.allclose(out, ref, atol=1e-5, rtol=1e-5), "mismatch vs reference"

    print("KERNEL_OK")
</pallas_src>

<mosaic_0001>
module attributes {stable_mosaic.version = 11 : i64} {
  func.func @_spectral_mul_kernel(%arg0: i32, %arg1: i32, %arg2: memref<2x2x4x128xf32, #tpu.memory_space<vmem>>, %arg3: memref<2x4x8x128xf32, #tpu.memory_space<vmem>>, %arg4: memref<2x2x8x128xf32, #tpu.memory_space<vmem>>) attributes {dimension_semantics = [#tpu.dimension_semantics<parallel>, #tpu.dimension_semantics<parallel>], iteration_bounds = array<i64: 1, 1>, scalar_prefetch = 0 : i64, scratch_operands = 0 : i64, tpu.core_type = #tpu.core_type<tc>, window_params = [{transform_indices = @transform_0, window_bounds = array<i64: 2, 2, 4, 128>}, {transform_indices = @transform_1, window_bounds = array<i64: 2, 4, 8, 128>}, {transform_indices = @transform_2, window_bounds = array<i64: 2, 2, 8, 128>}]} {
    %cst = arith.constant 0.000000e+00 : f32
    %0 = vector.broadcast %cst : f32 to vector<1x8x128xf32>
    %c0 = arith.constant 0 : index
    %c0_0 = arith.constant 0 : index
    %c0_1 = arith.constant 0 : index
    %c0_2 = arith.constant 0 : index
    %1 = vector.load %arg2[%c0, %c0_0, %c0_1, %c0_2] : memref<2x2x4x128xf32, #tpu.memory_space<vmem>>, vector<1x1x1x128xf32>
    %2 = vector.shape_cast %1 : vector<1x1x1x128xf32> to vector<1x1x128xf32>
    %3 = vector.shape_cast %2 : vector<1x1x128xf32> to vector<1x1x128xf32>
    %4 = vector.broadcast %3 : vector<1x1x128xf32> to vector<1x8x128xf32>
    %c1 = arith.constant 1 : index
    %c0_3 = arith.constant 0 : index
    %c0_4 = arith.constant 0 : index
    %c0_5 = arith.constant 0 : index
    %5 = vector.load %arg2[%c1, %c0_3, %c0_4, %c0_5] : memref<2x2x4x128xf32, #tpu.memory_space<vmem>>, vector<1x1x1x128xf32>
    %6 = vector.shape_cast %5 : vector<1x1x1x128xf32> to vector<1x1x128xf32>
    %7 = vector.shape_cast %6 : vector<1x1x128xf32> to vector<1x1x128xf32>
    %8 = vector.broadcast %7 : vector<1x1x128xf32> to vector<1x8x128xf32>
    %c0_6 = arith.constant 0 : index
    %c0_7 = arith.constant 0 : index
    %c0_8 = arith.constant 0 : index
    %c0_9 = arith.constant 0 : index
    %9 = vector.load %arg3[%c0_6, %c0_7, %c0_8, %c0_9] : memref<2x4x8x128xf32, #tpu.memory_space<vmem>>, vector<1x1x8x128xf32>
    %10 = vector.shape_cast %9 : vector<1x1x8x128xf32> to vector<1x8x128xf32>
    %c1_10 = arith.constant 1 : index
    %c0_11 = arith.constant 0 : index
    %c0_12 = arith.constant 0 : index
    %c0_13 = arith.constant 0 : index
    %11 = vector.load %arg3[%c1_10, %c0_11, %c0_12, %c0_13] : memref<2x4x8x128xf32, #tpu.memory_space<vmem>>, vector<1x1x8x128xf32>
    %12 = vector.shape_cast %11 : vector<1x1x8x128xf32> to vector<1x8x128xf32>
    %13 = arith.mulf %4, %10 : vector<1x8x128xf32>
    %14 = arith.addf %0, %13 : vector<1x8x128xf32>
    %15 = arith.mulf %8, %12 : vector<1x8x128xf32>
    %16 = arith.subf %14, %15 : vector<1x8x128xf32>
    %17 = arith.mulf %4, %12 : vector<1x8x128xf32>
    %18 = arith.addf %0, %17 : vector<1x8x128xf32>
    %19 = arith.mulf %8, %10 : vector<1x8x128xf32>
    %20 = arith.addf %18, %19 : vector<1x8x128xf32>
    %c0_14 = arith.constant 0 : index
    %c0_15 = arith.constant 0 : index
    %c1_16 = arith.constant 1 : index
    %c0_17 = arith.constant 0 : index
    %21 = vector.load %arg2[%c0_14, %c0_15, %c1_16, %c0_17] : memref<2x2x4x128xf32, #tpu.memory_space<vmem>>, vector<1x1x1x128xf32>
    %22 = vector.shape_cast %21 : vector<1x1x1x128xf32> to vector<1x1x128xf32>
    %23 = vector.shape_cast %22 : vector<1x1x128xf32> to vector<1x1x128xf32>
    %24 = vector.broadcast %23 : vector<1x1x128xf32> to vector<1x8x128xf32>
    %c1_18 = arith.constant 1 : index
    %c0_19 = arith.constant 0 : index
    %c1_20 = arith.constant 1 : index
    %c0_21 = arith.constant 0 : index
    %25 = vector.load %arg2[%c1_18, %c0_19, %c1_20, %c0_21] : memref<2x2x4x128xf32, #tpu.memory_space<vmem>>, vector<1x1x1x128xf32>
    %26 = vector.shape_cast %25 : vector<1x1x1x128xf32> to vector<1x1x128xf32>
    %27 = vector.shape_cast %26 : vector<1x1x128xf32> to vector<1x1x128xf32>
    %28 = vector.broadcast %27 : vector<1x1x128xf32> to vector<1x8x128xf32>
    %c0_22 = arith.constant 0 : index
    %c1_23 = arith.constant 1 : index
    %c0_24 = arith.constant 0 : index
    %c0_25 = arith.constant 0 : index
    %29 = vector.load %arg3[%c0_22, %c1_23, %c0_24, %c0_25] : memref<2x4x8x128xf32, #tpu.memory_space<vmem>>, vector<1x1x8x128xf32>
    %30 = vector.shape_cast %29 : vector<1x1x8x128xf32> to vector<1x8x128xf32>
    %c1_26 = arith.constant 1 : index
    %c1_27 = arith.constant 1 : index
    %c0_28 = arith.constant 0 : index
    %c0_29 = arith.constant 0 : index
    %31 = vector.load %arg3[%c1_26, %c1_27, %c0_28, %c0_29] : memref<2x4x8x128xf32, #tpu.memory_space<vmem>>, vector<1x1x8x128xf32>
    %32 = vector.shape_cast %31 : vector<1x1x8x128xf32> to vector<1x8x128xf32>
    %33 = arith.mulf %24, %30 : vector<1x8x128xf32>
    %34 = arith.addf %16, %33 : vector<1x8x128xf32>
    %35 = arith.mulf %28, %32 : vector<1x8x128xf32>
    %36 = arith.subf %34, %35 : vector<1x8x128xf32>
    %37 = arith.mulf %24, %32 : vector<1x8x128xf32>
    %38 = arith.addf %20, %37 : vector<1x8x128xf32>
    %39 = arith.mulf %28, %30 : vector<1x8x128xf32>
    %40 = arith.addf %38, %39 : vector<1x8x128xf32>
    %c0_30 = arith.constant 0 : index
    %c0_31 = arith.constant 0 : index
    %c2 = arith.constant 2 : index
    %c0_32 = arith.constant 0 : index
    %41 = vector.load %arg2[%c0_30, %c0_31, %c2, %c0_32] : memref<2x2x4x128xf32, #tpu.memory_space<vmem>>, vector<1x1x1x128xf32>
    %42 = vector.shape_cast %41 : vector<1x1x1x128xf32> to vector<1x1x128xf32>
    %43 = vector.shape_cast %42 : vector<1x1x128xf32> to vector<1x1x128xf32>
    %44 = vector.broadcast %43 : vector<1x1x128xf32> to vector<1x8x128xf32>
    %c1_33 = arith.constant 1 : index
    %c0_34 = arith.constant 0 : index
    %c2_35 = arith.constant 2 : index
    %c0_36 = arith.constant 0 : index
    %45 = vector.load %arg2[%c1_33, %c0_34, %c2_35, %c0_36] : memref<2x2x4x128xf32, #tpu.memory_space<vmem>>, vector<1x1x1x128xf32>
    %46 = vector.shape_cast %45 : vector<1x1x1x128xf32> to vector<1x1x128xf32>
    %47 = vector.shape_cast %46 : vector<1x1x128xf32> to vector<1x1x128xf32>
    %48 = vector.broadcast %47 : vector<1x1x128xf32> to vector<1x8x128xf32>
    %c0_37 = arith.constant 0 : index
    %c2_38 = arith.constant 2 : index
    %c0_39 = arith.constant 0 : index
    %c0_40 = arith.constant 0 : index
    %49 = vector.load %arg3[%c0_37, %c2_38, %c0_39, %c0_40] : memref<2x4x8x128xf32, #tpu.memory_space<vmem>>, vector<1x1x8x128xf32>
    %50 = vector.shape_cast %49 : vector<1x1x8x128xf32> to vector<1x8x128xf32>
    %c1_41 = arith.constant 1 : index
    %c2_42 = arith.constant 2 : index
    %c0_43 = arith.constant 0 : index
    %c0_44 = arith.constant 0 : index
    %51 = vector.load %arg3[%c1_41, %c2_42, %c0_43, %c0_44] : memref<2x4x8x128xf32, #tpu.memory_space<vmem>>, vector<1x1x8x128xf32>
    %52 = vector.shape_cast %51 : vector<1x1x8x128xf32> to vector<1x8x128xf32>
    %53 = arith.mulf %44, %50 : vector<1x8x128xf32>
    %54 = arith.addf %36, %53 : vector<1x8x128xf32>
    %55 = arith.mulf %48, %52 : vector<1x8x128xf32>
    %56 = arith.subf %54, %55 : vector<1x8x128xf32>
    %57 = arith.mulf %44, %52 : vector<1x8x128xf32>
    %58 = arith.addf %40, %57 : vector<1x8x128xf32>
    %59 = arith.mulf %48, %50 : vector<1x8x128xf32>
    %60 = arith.addf %58, %59 : vector<1x8x128xf32>
    %c0_45 = arith.constant 0 : index
    %c0_46 = arith.constant 0 : index
    %c3 = arith.constant 3 : index
    %c0_47 = arith.constant 0 : index
    %61 = vector.load %arg2[%c0_45, %c0_46, %c3, %c0_47] : memref<2x2x4x128xf32, #tpu.memory_space<vmem>>, vector<1x1x1x128xf32>
    %62 = vector.shape_cast %61 : vector<1x1x1x128xf32> to vector<1x1x128xf32>
    %63 = vector.shape_cast %62 : vector<1x1x128xf32> to vector<1x1x128xf32>
    %64 = vector.broadcast %63 : vector<1x1x128xf32> to vector<1x8x128xf32>
    %c1_48 = arith.constant 1 : index
    %c0_49 = arith.constant 0 : index
    %c3_50 = arith.constant 3 : index
    %c0_51 = arith.constant 0 : index
    %65 = vector.load %arg2[%c1_48, %c0_49, %c3_50, %c0_51] : memref<2x2x4x128xf32, #tpu.memory_space<vmem>>, vector<1x1x1x128xf32>
    %66 = vector.shape_cast %65 : vector<1x1x1x128xf32> to vector<1x1x128xf32>
    %67 = vector.shape_cast %66 : vector<1x1x128xf32> to vector<1x1x128xf32>
    %68 = vector.broadcast %67 : vector<1x1x128xf32> to vector<1x8x128xf32>
    %c0_52 = arith.constant 0 : index
    %c3_53 = arith.constant 3 : index
    %c0_54 = arith.constant 0 : index
    %c0_55 = arith.constant 0 : index
    %69 = vector.load %arg3[%c0_52, %c3_53, %c0_54, %c0_55] : memref<2x4x8x128xf32, #tpu.memory_space<vmem>>, vector<1x1x8x128xf32>
    %70 = vector.shape_cast %69 : vector<1x1x8x128xf32> to vector<1x8x128xf32>
    %c1_56 = arith.constant 1 : index
    %c3_57 = arith.constant 3 : index
    %c0_58 = arith.constant 0 : index
    %c0_59 = arith.constant 0 : index
    %71 = vector.load %arg3[%c1_56, %c3_57, %c0_58, %c0_59] : memref<2x4x8x128xf32, #tpu.memory_space<vmem>>, vector<1x1x8x128xf32>
    %72 = vector.shape_cast %71 : vector<1x1x8x128xf32> to vector<1x8x128xf32>
    %73 = arith.mulf %64, %70 : vector<1x8x128xf32>
    %74 = arith.addf %56, %73 : vector<1x8x128xf32>
    %75 = arith.mulf %68, %72 : vector<1x8x128xf32>
    %76 = arith.subf %74, %75 : vector<1x8x128xf32>
    %77 = arith.mulf %64, %72 : vector<1x8x128xf32>
    %78 = arith.addf %60, %77 : vector<1x8x128xf32>
    %79 = arith.mulf %68, %70 : vector<1x8x128xf32>
    %80 = arith.addf %78, %79 : vector<1x8x128xf32>
    %c0_60 = arith.constant 0 : index
    %c0_61 = arith.constant 0 : index
    %c0_62 = arith.constant 0 : index
    %c0_63 = arith.constant 0 : index
    %81 = vector.load %arg4[%c0_60, %c0_61, %c0_62, %c0_63] : memref<2x2x8x128xf32, #tpu.memory_space<vmem>>, vector<1x1x8x128xf32>
    %82 = vector.shape_cast %81 : vector<1x1x8x128xf32> to vector<1x8x128xf32>
    %83 = vector.shape_cast %76 : vector<1x8x128xf32> to vector<1x1x8x128xf32>
    tpu.vector_store %arg4[%c0_60, %c0_61, %c0_62, %c0_63], %83 {strides = array<i32>} : memref<2x2x8x128xf32, #tpu.memory_space<vmem>>, vector<1x1x8x128xf32>,
    %c1_64 = arith.constant 1 : index
    %c0_65 = arith.constant 0 : index
    %c0_66 = arith.constant 0 : index
    %c0_67 = arith.constant 0 : index
    %84 = vector.load %arg4[%c1_64, %c0_65, %c0_66, %c0_67] : memref<2x2x8x128xf32, #tpu.memory_space<vmem>>, vector<1x1x8x128xf32>
    %85 = vector.shape_cast %84 : vector<1x1x8x128xf32> to vector<1x8x128xf32>
    %86 = vector.shape_cast %80 : vector<1x8x128xf32> to vector<1x1x8x128xf32>
    tpu.vector_store %arg4[%c1_64, %c0_65, %c0_66, %c0_67], %86 {strides = array<i32>} : memref<2x2x8x128xf32, #tpu.memory_space<vmem>>, vector<1x1x8x128xf32>,
    %cst_68 = arith.constant 0.000000e+00 : f32
    %87 = vector.broadcast %cst_68 : f32 to vector<1x8x128xf32>
    %c0_69 = arith.constant 0 : index
    %c1_70 = arith.constant 1 : index
    %c0_71 = arith.constant 0 : index
    %c0_72 = arith.constant 0 : index
    %88 = vector.load %arg2[%c0_69, %c1_70, %c0_71, %c0_72] : memref<2x2x4x128xf32, #tpu.memory_space<vmem>>, vector<1x1x1x128xf32>
    %89 = vector.shape_cast %88 : vector<1x1x1x128xf32> to vector<1x1x128xf32>
    %90 = vector.shape_cast %89 : vector<1x1x128xf32> to vector<1x1x128xf32>
    %91 = vector.broadcast %90 : vector<1x1x128xf32> to vector<1x8x128xf32>
    %c1_73 = arith.constant 1 : index
    %c1_74 = arith.constant 1 : index
    %c0_75 = arith.constant 0 : index
    %c0_76 = arith.constant 0 : index
    %92 = vector.load %arg2[%c1_73, %c1_74, %c0_75, %c0_76] : memref<2x2x4x128xf32, #tpu.memory_space<vmem>>, vector<1x1x1x128xf32>
    %93 = vector.shape_cast %92 : vector<1x1x1x128xf32> to vector<1x1x128xf32>
    %94 = vector.shape_cast %93 : vector<1x1x128xf32> to vector<1x1x128xf32>
    %95 = vector.broadcast %94 : vector<1x1x128xf32> to vector<1x8x128xf32>
    %c0_77 = arith.constant 0 : index
    %c0_78 = arith.constant 0 : index
    %c0_79 = arith.constant 0 : index
    %c0_80 = arith.constant 0 : index
    %96 = vector.load %arg3[%c0_77, %c0_78, %c0_79, %c0_80] : memref<2x4x8x128xf32, #tpu.memory_space<vmem>>, vector<1x1x8x128xf32>
    %97 = vector.shape_cast %96 : vector<1x1x8x128xf32> to vector<1x8x128xf32>
    %c1_81 = arith.constant 1 : index
    %c0_82 = arith.constant 0 : index
    %c0_83 = arith.constant 0 : index
    %c0_84 = arith.constant 0 : index
    %98 = vector.load %arg3[%c1_81, %c0_82, %c0_83, %c0_84] : memref<2x4x8x128xf32, #tpu.memory_space<vmem>>, vector<1x1x8x128xf32>
    %99 = vector.shape_cast %98 : vector<1x1x8x128xf32> to vector<1x8x128xf32>
    %100 = arith.mulf %91, %97 : vector<1x8x128xf32>
    %101 = arith.addf %87, %100 : vector<1x8x128xf32>
    %102 = arith.mulf %95, %99 : vector<1x8x128xf32>
    %103 = arith.subf %101, %102 : vector<1x8x128xf32>
    %104 = arith.mulf %91, %99 : vector<1x8x128xf32>
    %105 = arith.addf %87, %104 : vector<1x8x128xf32>
    %106 = arith.mulf %95, %97 : vector<1x8x128xf32>
    %107 = arith.addf %105, %106 : vector<1x8x128xf32>
    %c0_85 = arith.constant 0 : index
    %c1_86 = arith.constant 1 : index
    %c1_87 = arith.constant 1 : index
    %c0_88 = arith.constant 0 : index
    %108 = vector.load %arg2[%c0_85, %c1_86, %c1_87, %c0_88] : memref<2x2x4x128xf32, #tpu.memory_space<vmem>>, vector<1x1x1x128xf32>
    %109 = vector.shape_cast %108 : vector<1x1x1x128xf32> to vector<1x1x128xf32>
    %110 = vector.shape_cast %109 : vector<1x1x128xf32> to vector<1x1x128xf32>
    %111 = vector.broadcast %110 : vector<1x1x128xf32> to vector<1x8x128xf32>
    %c1_89 = arith.constant 1 : index
    %c1_90 = arith.constant 1 : index
    %c1_91 = arith.constant 1 : index
    %c0_92 = arith.constant 0 : index
    %112 = vector.load %arg2[%c1_89, %c1_90, %c1_91, %c0_92] : memref<2x2x4x128xf32, #tpu.memory_space<vmem>>, vector<1x1x1x128xf32>
    %113 = vector.shape_cast %112 : vector<1x1x1x128xf32> to vector<1x1x128xf32>
    %114 = vector.shape_cast %113 : vector<1x1x128xf32> to vector<1x1x128xf32>
    %115 = vector.broadcast %114 : vector<1x1x128xf32> to vector<1x8x128xf32>
    %c0_93 = arith.constant 0 : index
    %c1_94 = arith.constant 1 : index
    %c0_95 = arith.constant 0 : index
    %c0_96 = arith.constant 0 : index
    %116 = vector.load %arg3[%c0_93, %c1_94, %c0_95, %c0_96] : memref<2x4x8x128xf32, #tpu.memory_space<vmem>>, vector<1x1x8x128xf32>
    %117 = vector.shape_cast %116 : vector<1x1x8x128xf32> to vector<1x8x128xf32>
    %c1_97 = arith.constant 1 : index
    %c1_98 = arith.constant 1 : index
    %c0_99 = arith.constant 0 : index
    %c0_100 = arith.constant 0 : index
    %118 = vector.load %arg3[%c1_97, %c1_98, %c0_99, %c0_100] : memref<2x4x8x128xf32, #tpu.memory_space<vmem>>, vector<1x1x8x128xf32>
    %119 = vector.shape_cast %118 : vector<1x1x8x128xf32> to vector<1x8x128xf32>
    %120 = arith.mulf %111, %117 : vector<1x8x128xf32>
    %121 = arith.addf %103, %120 : vector<1x8x128xf32>
    %122 = arith.mulf %115, %119 : vector<1x8x128xf32>
    %123 = arith.subf %121, %122 : vector<1x8x128xf32>
    %124 = arith.mulf %111, %119 : vector<1x8x128xf32>
    %125 = arith.addf %107, %124 : vector<1x8x128xf32>
    %126 = arith.mulf %115, %117 : vector<1x8x128xf32>
    %127 = arith.addf %125, %126 : vector<1x8x128xf32>
    %c0_101 = arith.constant 0 : index
    %c1_102 = arith.constant 1 : index
    %c2_103 = arith.constant 2 : index
    %c0_104 = arith.constant 0 : index
    %128 = vector.load %arg2[%c0_101, %c1_102, %c2_103, %c0_104] : memref<2x2x4x128xf32, #tpu.memory_space<vmem>>, vector<1x1x1x128xf32>
    %129 = vector.shape_cast %128 : vector<1x1x1x128xf32> to vector<1x1x128xf32>
    %130 = vector.shape_cast %129 : vector<1x1x128xf32> to vector<1x1x128xf32>
    %131 = vector.broadcast %130 : vector<1x1x128xf32> to vector<1x8x128xf32>
    %c1_105 = arith.constant 1 : index
    %c1_106 = arith.constant 1 : index
    %c2_107 = arith.constant 2 : index
    %c0_108 = arith.constant 0 : index
    %132 = vector.load %arg2[%c1_105, %c1_106, %c2_107, %c0_108] : memref<2x2x4x128xf32, #tpu.memory_space<vmem>>, vector<1x1x1x128xf32>
    %133 = vector.shape_cast %132 : vector<1x1x1x128xf32> to vector<1x1x128xf32>
    %134 = vector.shape_cast %133 : vector<1x1x128xf32> to vector<1x1x128xf32>
    %135 = vector.broadcast %134 : vector<1x1x128xf32> to vector<1x8x128xf32>
    %c0_109 = arith.constant 0 : index
    %c2_110 = arith.constant 2 : index
    %c0_111 = arith.constant 0 : index
    %c0_112 = arith.constant 0 : index
    %136 = vector.load %arg3[%c0_109, %c2_110, %c0_111, %c0_112] : memref<2x4x8x128xf32, #tpu.memory_space<vmem>>, vector<1x1x8x128xf32>
    %137 = vector.shape_cast %136 : vector<1x1x8x128xf32> to vector<1x8x128xf32>
    %c1_113 = arith.constant 1 : index
    %c2_114 = arith.constant 2 : index
    %c0_115 = arith.constant 0 : index
    %c0_116 = arith.constant 0 : index
    %138 = vector.load %arg3[%c1_113, %c2_114, %c0_115, %c0_116] : memref<2x4x8x128xf32, #tpu.memory_space<vmem>>, vector<1x1x8x128xf32>
    %139 = vector.shape_cast %138 : vector<1x1x8x128xf32> to vector<1x8x128xf32>
    %140 = arith.mulf %131, %137 : vector<1x8x128xf32>
    %141 = arith.addf %123, %140 : vector<1x8x128xf32>
    %142 = arith.mulf %135, %139 : vector<1x8x128xf32>
    %143 = arith.subf %141, %142 : vector<1x8x128xf32>
    %144 = arith.mulf %131, %139 : vector<1x8x128xf32>
    %145 = arith.addf %127, %144 : vector<1x8x128xf32>
    %146 = arith.mulf %135, %137 : vector<1x8x128xf32>
    %147 = arith.addf %145, %146 : vector<1x8x128xf32>
    %c0_117 = arith.constant 0 : index
    %c1_118 = arith.constant 1 : index
    %c3_119 = arith.constant 3 : index
    %c0_120 = arith.constant 0 : index
    %148 = vector.load %arg2[%c0_117, %c1_118, %c3_119, %c0_120] : memref<2x2x4x128xf32, #tpu.memory_space<vmem>>, vector<1x1x1x128xf32>
    %149 = vector.shape_cast %148 : vector<1x1x1x128xf32> to vector<1x1x128xf32>
    %150 = vector.shape_cast %149 : vector<1x1x128xf32> to vector<1x1x128xf32>
    %151 = vector.broadcast %150 : vector<1x1x128xf32> to vector<1x8x128xf32>
    %c1_121 = arith.constant 1 : index
    %c1_122 = arith.constant 1 : index
    %c3_123 = arith.constant 3 : index
    %c0_124 = arith.constant 0 : index
    %152 = vector.load %arg2[%c1_121, %c1_122, %c3_123, %c0_124] : memref<2x2x4x128xf32, #tpu.memory_space<vmem>>, vector<1x1x1x128xf32>
    %153 = vector.shape_cast %152 : vector<1x1x1x128xf32> to vector<1x1x128xf32>
    %154 = vector.shape_cast %153 : vector<1x1x128xf32> to vector<1x1x128xf32>
    %155 = vector.broadcast %154 : vector<1x1x128xf32> to vector<1x8x128xf32>
    %c0_125 = arith.constant 0 : index
    %c3_126 = arith.constant 3 : index
    %c0_127 = arith.constant 0 : index
    %c0_128 = arith.constant 0 : index
    %156 = vector.load %arg3[%c0_125, %c3_126, %c0_127, %c0_128] : memref<2x4x8x128xf32, #tpu.memory_space<vmem>>, vector<1x1x8x128xf32>
    %157 = vector.shape_cast %156 : vector<1x1x8x128xf32> to vector<1x8x128xf32>
    %c1_129 = arith.constant 1 : index
    %c3_130 = arith.constant 3 : index
    %c0_131 = arith.constant 0 : index
    %c0_132 = arith.constant 0 : index
    %158 = vector.load %arg3[%c1_129, %c3_130, %c0_131, %c0_132] : memref<2x4x8x128xf32, #tpu.memory_space<vmem>>, vector<1x1x8x128xf32>
    %159 = vector.shape_cast %158 : vector<1x1x8x128xf32> to vector<1x8x128xf32>
    %160 = arith.mulf %151, %157 : vector<1x8x128xf32>
    %161 = arith.addf %143, %160 : vector<1x8x128xf32>
    %162 = arith.mulf %155, %159 : vector<1x8x128xf32>
    %163 = arith.subf %161, %162 : vector<1x8x128xf32>
    %164 = arith.mulf %151, %159 : vector<1x8x128xf32>
    %165 = arith.addf %147, %164 : vector<1x8x128xf32>
    %166 = arith.mulf %155, %157 : vector<1x8x128xf32>
    %167 = arith.addf %165, %166 : vector<1x8x128xf32>
    %c0_133 = arith.constant 0 : index
    %c1_134 = arith.constant 1 : index
    %c0_135 = arith.constant 0 : index
    %c0_136 = arith.constant 0 : index
    %168 = vector.load %arg4[%c0_133, %c1_134, %c0_135, %c0_136] : memref<2x2x8x128xf32, #tpu.memory_space<vmem>>, vector<1x1x8x128xf32>
    %169 = vector.shape_cast %168 : vector<1x1x8x128xf32> to vector<1x8x128xf32>
    %170 = vector.shape_cast %163 : vector<1x8x128xf32> to vector<1x1x8x128xf32>
    tpu.vector_store %arg4[%c0_133, %c1_134, %c0_135, %c0_136], %170 {strides = array<i32>} : memref<2x2x8x128xf32, #tpu.memory_space<vmem>>, vector<1x1x8x128xf32>,
    %c1_137 = arith.constant 1 : index
    %c1_138 = arith.constant 1 : index
    %c0_139 = arith.constant 0 : index
    %c0_140 = arith.constant 0 : index
    %171 = vector.load %arg4[%c1_137, %c1_138, %c0_139, %c0_140] : memref<2x2x8x128xf32, #tpu.memory_space<vmem>>, vector<1x1x8x128xf32>
    %172 = vector.shape_cast %171 : vector<1x1x8x128xf32> to vector<1x8x128xf32>
    %173 = vector.shape_cast %167 : vector<1x8x128xf32> to vector<1x1x8x128xf32>
    tpu.vector_store %arg4[%c1_137, %c1_138, %c0_139, %c0_140], %173 {strides = array<i32>} : memref<2x2x8x128xf32, #tpu.memory_space<vmem>>, vector<1x1x8x128xf32>,
    return
  }
  func.func @transform_0(%arg0: i32, %arg1: i32) -> (i32, i32, i32, i32) {
    %c0_i32 = arith.constant 0 : i32
    %c0_i32_0 = arith.constant 0 : i32
    %c0_i32_1 = arith.constant 0 : i32
    %c0_i32_2 = arith.constant 0 : i32
    return %c0_i32, %c0_i32_0, %c0_i32_1, %arg0 : i32, i32, i32, i32
  }
  func.func @transform_1(%arg0: i32, %arg1: i32) -> (i32, i32, i32, i32) {
    %c0_i32 = arith.constant 0 : i32
    %c0_i32_0 = arith.constant 0 : i32
    %c0_i32_1 = arith.constant 0 : i32
    return %c0_i32, %c0_i32_0, %arg1, %arg0 : i32, i32, i32, i32
  }
  func.func @transform_2(%arg0: i32, %arg1: i32) -> (i32, i32, i32, i32) {
    %c0_i32 = arith.constant 0 : i32
    %c0_i32_0 = arith.constant 0 : i32
    %c0_i32_1 = arith.constant 0 : i32
    return %c0_i32, %c0_i32_0, %arg1, %arg0 : i32, i32, i32, i32
  }
}

</mosaic_0001>

<llo_original>
// kernel: custom-call
$region0: #{custom-call}
  %s0 = inlined_call_operand.hbm [shape: c64[4,4,4,4], index: 0, kind: input, shape index: {}]
  %s1 = inlined_call_operand.vmem [shape: f32[4,4,4,4], index: 1, kind: output, shape index: {}]
  $region1: #{custom-call} parent=0
    #allocation0 [shape = 's32[1]{0}', space=sflag, size = 0x4, scoped, tag = 'scoped memory for custom-call']
    %2 = vsyncpa [#allocation0], 0
    %s3 = sshll.u32 %s1, 4
    %s4 = int_to_ptr.vmem [resolvable:$true] %s3
    %6 = dma.hbm_to_vmem [thread:$0]  %s0, 1024, %s4, [#allocation0]
    %7 = dma.done [#allocation0], 1024
    %8 = vsyncpa [#allocation0], 1

// kernel: custom-call.1
$region0: #{custom-call.1}
  %s0 = inlined_call_operand.hbm [shape: c64[4,4,4,4], index: 0, kind: input, shape index: {}]
  %s1 = inlined_call_operand.vmem [shape: f32[4,4,4,4], index: 1, kind: output, shape index: {}]
  %s2 = scalar_lea.hbm %s0, 1024
  $region1: #{custom-call.1} parent=0
    #allocation0 [shape = 's32[1]{0}', space=sflag, size = 0x4, scoped, tag = 'scoped memory for custom-call.1']
    %3 = vsyncpa [#allocation0], 0
    %s4 = sshll.u32 %s1, 4
    %s5 = int_to_ptr.vmem [resolvable:$true] %s4
    %7 = dma.hbm_to_vmem [thread:$0]  %s2, 1024, %s5, [#allocation0]
    %8 = dma.done [#allocation0], 1024
    %9 = vsyncpa [#allocation0], 1

// kernel: spectral_conv2d.1
$region0: #{spectral_conv2d.1}
  #allocation0 [shape = 'u32[]', space=smem, size = 0x4, offset = 0x4, fixed_abs, tag = 'smem constant byte address 0x4 - core index']
  #allocation1 [shape = 'u32[144,128]{1,0:T(1,128)}', space=vmem, size = 0x12000, scoped, tag = 'internal scratch']
  %s0 = inlined_call_operand.vmem [shape: f32[2,2,4,128], index: 0, kind: input, shape index: {}]
  %s1 = inlined_call_operand.vmem [shape: f32[2,4,8,128], index: 1, kind: input, shape index: {}]
  %s2 = inlined_call_operand.vmem [shape: f32[2,2,8,128], index: 2, kind: output, shape index: {}]
  %s3 = sld [smem:[#allocation0]]
  $region18: #{spectral_conv2d.1} parent=0
    _
  %s5 = ssub.s32 1, %s3
  %s6 = scalar_select 0, %s5, %s3
  // Predicated region
  $region2: #{spectral_conv2d.1} parent=0 // pred_check
    _
  $region3: #{spectral_conv2d.1} parent=0 // pred_check_branch
    %8 = sbr.rel (0) target = $region5
  $region4: #{spectral_conv2d.1} parent=0 // pred_region
    _
  $region5: #{spectral_conv2d.1} parent=0 // pred_fallthru
    _
  // Predicated region
  $region6: #{spectral_conv2d.1} parent=0 // pred_check
    _
  $region7: #{spectral_conv2d.1} parent=0 // pred_check_branch
    %10 = sbr.rel (0) target = $region9
  $region8: #{spectral_conv2d.1} parent=0 // pred_region
    _
  $region9: #{spectral_conv2d.1} parent=0 // pred_fallthru
    _
  %v11 = vld [vmem:[%s0] sm:$0x1]
  %v12 = vlaneseq
  %v13 = vshrl.u32 %v12, 7
  %v14 = vsub.s32 0, %v13
  %v15 = vrot.slane %v11, %v14
  %s16 = scalar_lea.vmem %s0, 8
  %v17 = vld [vmem:[%s16] sm:$0x1]
  %v18 = vlaneseq
  %v19 = vshrl.u32 %v18, 7
  %v20 = vsub.s32 0, %v19
  %v21 = vrot.slane %v17, %v20
  %v22 = vld [vmem:[%s1] sm:$0xff]
  %s23 = scalar_lea.vmem %s1, 32
  %v24 = vld [vmem:[%s23] sm:$0xff]
  %v25 = vmul.f32 %v15, %v22
  %v26 = vadd.f32 %v25, 0.0
  %v27 = vmul.f32 %v21, %v24
  %v28 = vsub.f32 %v26, %v27
  %v29 = vmul.f32 %v15, %v24
  %v30 = vadd.f32 %v29, 0.0
  %v31 = vmul.f32 %v21, %v22
  %v32 = vadd.f32 %v30, %v31
  %v33 = vld [vmem:[%s0 + $0x1] sm:$0x1]
  %v34 = vlaneseq
  %v35 = vshrl.u32 %v34, 7
  %v36 = vsub.s32 0, %v35
  %v37 = vrot.slane %v33, %v36
  %v38 = vld [vmem:[%s16 + $0x1] sm:$0x1]
  %v39 = vlaneseq
  %v40 = vshrl.u32 %v39, 7
  %v41 = vsub.s32 0, %v40
  %v42 = vrot.slane %v38, %v41
  %s43 = scalar_lea.vmem %s1, 8
  %v44 = vld [vmem:[%s43] sm:$0xff]
  %s45 = scalar_lea.vmem %s1, 40
  %v46 = vld [vmem:[%s45] sm:$0xff]
  %v47 = vmul.f32 %v37, %v44
  %v48 = vadd.f32 %v28, %v47
  %v49 = vmul.f32 %v42, %v46
  %v50 = vsub.f32 %v48, %v49
  %v51 = vmul.f32 %v37, %v46
  %v52 = vadd.f32 %v32, %v51
  %v53 = vmul.f32 %v42, %v44
  %v54 = vadd.f32 %v52, %v53
  %v55 = vld [vmem:[%s0 + $0x2] sm:$0x1]
  %v56 = vlaneseq
  %v57 = vshrl.u32 %v56, 7
  %v58 = vsub.s32 0, %v57
  %v59 = vrot.slane %v55, %v58
  %v60 = vld [vmem:[%s16 + $0x2] sm:$0x1]
  %v61 = vlaneseq
  %v62 = vshrl.u32 %v61, 7
  %v63 = vsub.s32 0, %v62
  %v64 = vrot.slane %v60, %v63
  %s65 = scalar_lea.vmem %s1, 16
  %v66 = vld [vmem:[%s65] sm:$0xff]
  %s67 = scalar_lea.vmem %s1, 48
  %v68 = vld [vmem:[%s67] sm:$0xff]
  %v69 = vmul.f32 %v59, %v66
  %v70 = vadd.f32 %v50, %v69
  %v71 = vmul.f32 %v64, %v68
  %v72 = vsub.f32 %v70, %v71
  %v73 = vmul.f32 %v59, %v68
  %v74 = vadd.f32 %v54, %v73
  %v75 = vmul.f32 %v64, %v66
  %v76 = vadd.f32 %v74, %v75
  %v77 = vld [vmem:[%s0 + $0x3] sm:$0x1]
  %v78 = vlaneseq
  %v79 = vshrl.u32 %v78, 7
  %v80 = vsub.s32 0, %v79
  %v81 = vrot.slane %v77, %v80
  %v82 = vld [vmem:[%s16 + $0x3] sm:$0x1]
  %v83 = vlaneseq
  %v84 = vshrl.u32 %v83, 7
  %v85 = vsub.s32 0, %v84
  %v86 = vrot.slane %v82, %v85
  %s87 = scalar_lea.vmem %s1, 24
  %v88 = vld [vmem:[%s87] sm:$0xff]
  %s89 = scalar_lea.vmem %s1, 56
  %v90 = vld [vmem:[%s89] sm:$0xff]
  %v91 = vmul.f32 %v81, %v88
  %v92 = vadd.f32 %v72, %v91
  %v93 = vmul.f32 %v86, %v90
  %v94 = vsub.f32 %v92, %v93
  %v95 = vmul.f32 %v81, %v90
  %v96 = vadd.f32 %v76, %v95
  %v97 = vmul.f32 %v86, %v88
  %v98 = vadd.f32 %v96, %v97
  %99 = vst [vmem:[%s2] sm:$0xff] %v94
  %s100 = scalar_lea.vmem %s2, 16
  %101 = vst [vmem:[%s100] sm:$0xff] %v98
  %s102 = scalar_lea.vmem %s0, 4
  %v103 = vld [vmem:[%s102] sm:$0x1]
  %v104 = vlaneseq
  %v105 = vshrl.u32 %v104, 7
  %v106 = vsub.s32 0, %v105
  %v107 = vrot.slane %v103, %v106
  %s108 = scalar_lea.vmem %s0, 12
  %v109 = vld [vmem:[%s108] sm:$0x1]
  %v110 = vlaneseq
  %v111 = vshrl.u32 %v110, 7
  %v112 = vsub.s32 0, %v111
  %v113 = vrot.slane %v109, %v112
  %v114 = vld [vmem:[%s1] sm:$0xff]
  %v115 = vld [vmem:[%s23] sm:$0xff]
  %v116 = vmul.f32 %v107, %v114
  %v117 = vadd.f32 %v116, 0.0
  %v118 = vmul.f32 %v113, %v115
  %v119 = vsub.f32 %v117, %v118
  %v120 = vmul.f32 %v107, %v115
  %v121 = vadd.f32 %v120, 0.0
  %v122 = vmul.f32 %v113, %v114
  %v123 = vadd.f32 %v121, %v122
  %v124 = vld [vmem:[%s102 + $0x1] sm:$0x1]
  %v125 = vlaneseq
  %v126 = vshrl.u32 %v125, 7
  %v127 = vsub.s32 0, %v126
  %v128 = vrot.slane %v124, %v127
  %v129 = vld [vmem:[%s108 + $0x1] sm:$0x1]
  %v130 = vlaneseq
  %v131 = vshrl.u32 %v130, 7
  %v132 = vsub.s32 0, %v131
  %v133 = vrot.slane %v129, %v132
  %v134 = vld [vmem:[%s43] sm:$0xff]
  %v135 = vld [vmem:[%s45] sm:$0xff]
  %v136 = vmul.f32 %v128, %v134
  %v137 = vadd.f32 %v119, %v136
  %v138 = vmul.f32 %v133, %v135
  %v139 = vsub.f32 %v137, %v138
  %v140 = vmul.f32 %v128, %v135
  %v141 = vadd.f32 %v123, %v140
  %v142 = vmul.f32 %v133, %v134
  %v143 = vadd.f32 %v141, %v142
  %v144 = vld [vmem:[%s102 + $0x2] sm:$0x1]
  %v145 = vlaneseq
  %v146 = vshrl.u32 %v145, 7
  %v147 = vsub.s32 0, %v146
  %v148 = vrot.slane %v144, %v147
  %v149 = vld [vmem:[%s108 + $0x2] sm:$0x1]
  %v150 = vlaneseq
  %v151 = vshrl.u32 %v150, 7
  %v152 = vsub.s32 0, %v151
  %v153 = vrot.slane %v149, %v152
  %v154 = vld [vmem:[%s65] sm:$0xff]
  %v155 = vld [vmem:[%s67] sm:$0xff]
  %v156 = vmul.f32 %v148, %v154
  %v157 = vadd.f32 %v139, %v156
  %v158 = vmul.f32 %v153, %v155
  %v159 = vsub.f32 %v157, %v158
  %v160 = vmul.f32 %v148, %v155
  %v161 = vadd.f32 %v143, %v160
  %v162 = vmul.f32 %v153, %v154
  %v163 = vadd.f32 %v161, %v162
  %v164 = vld [vmem:[%s102 + $0x3] sm:$0x1]
  %v165 = vlaneseq
  %v166 = vshrl.u32 %v165, 7
  %v167 = vsub.s32 0, %v166
  %v168 = vrot.slane %v164, %v167
  %v169 = vld [vmem:[%s108 + $0x3] sm:$0x1]
  %v170 = vlaneseq
  %v171 = vshrl.u32 %v170, 7
  %v172 = vsub.s32 0, %v171
  %v173 = vrot.slane %v169, %v172
  %v174 = vld [vmem:[%s87] sm:$0xff]
  %v175 = vld [vmem:[%s89] sm:$0xff]
  %v176 = vmul.f32 %v168, %v174
  %v177 = vadd.f32 %v159, %v176
  %v178 = vmul.f32 %v173, %v175
  %v179 = vsub.f32 %v177, %v178
  %v180 = vmul.f32 %v168, %v175
  %v181 = vadd.f32 %v163, %v180
  %v182 = vmul.f32 %v173, %v174
  %v183 = vadd.f32 %v181, %v182
  %s184 = scalar_lea.vmem %s2, 8
  %185 = vst [vmem:[%s184] sm:$0xff] %v179
  %s186 = scalar_lea.vmem %s2, 24
  %187 = vst [vmem:[%s186] sm:$0xff] %v183
  // Predicated region
  $region10: #{spectral_conv2d.1} parent=0 // pred_check
    _
  $region11: #{spectral_conv2d.1} parent=0 // pred_check_branch
    %189 = sbr.rel (0) target = $region13
  $region12: #{spectral_conv2d.1} parent=0 // pred_region
    _
  $region13: #{spectral_conv2d.1} parent=0 // pred_fallthru
    _
  // Predicated region
  $region14: #{spectral_conv2d.1} parent=0 // pred_check
    _
  $region15: #{spectral_conv2d.1} parent=0 // pred_check_branch
    %191 = sbr.rel (0) target = $region17
  $region16: #{spectral_conv2d.1} parent=0 // pred_region
    _
  $region17: #{spectral_conv2d.1} parent=0 // pred_fallthru
    _

// kernel: reverse.0
$region0: #{reverse.0}
  %s0 = inlined_call_operand.vmem [shape: f32[2,4,16,7], index: 0, kind: input, shape index: {}]
  %s1 = inlined_call_operand.vmem [shape: f32[2,4,16,7], index: 1, kind: output, shape index: {}]
  $region1: #{reverse.0} parent=0
    #allocation0 [shape = 'u8[65536]{0}', space=vmem, size = 0x10000, scoped, tag = 'operand span for operand 0']
    #allocation1 [shape = 'u8[32768]{0}', space=vmem, size = 0x8000, scoped, tag = 'operand span for operand 1']
    %s2 = scalar_lea.vmem [#allocation0], 8
    // Predicated region
    $region2: #{reverse.0} parent=1 // pred_check
      _
    $region3: #{reverse.0} parent=1 // pred_check_branch
      %4 = sbr.rel (0) target = $region5
    $region4: #{reverse.0} parent=1 // pred_region
      // Predicated region
      $region6: #{reverse.0} parent=4 // pred_check
        _
      $region7: #{reverse.0} parent=4 // pred_check_branch
        %6 = sbr.rel (0) target = $region9
      $region8: #{reverse.0} parent=4 // pred_region
        // Predicated region
        $region21: #{reverse.0} parent=8 // pred_check
          _
        $region22: #{reverse.0} parent=8 // pred_check_branch
          %36 = sbr.rel (0) target = $region24
        $region23: #{reverse.0} parent=8 // pred_region
          loop: start=0, step=1, limit=1
          $region25: #{reverse.0} parent=23 // loop_pre_header
            _
          $region26: #{reverse.0} parent=23 // loop_header
            %s38 = sphi 0, %s42
            %p39 = scmp.ge.s32.totalorder %s38, 1
            %s43 = sphi %s0, %s0
            %s44 = sphi %s2, %s2
          $region27: #{reverse.0} parent=23 // loop_header_branch
            %41 = sbr.rel (%p39) target = $region31
          $region28: #{reverse.0} parent=23 // loop_body
            %v45 = vld [vmem:[%s43] sm:$0xff]
            %46 = vst [vmem:[%s44] sm:$0xff] %v45
            %v47 = vld [vmem:[%s43 + $0x8] sm:$0xff]
            %48 = vst [vmem:[%s44 + $0x10] sm:$0xff] %v47
            %v49 = vld [vmem:[%s43 + $0x10] sm:$0xff]
            %50 = vst [vmem:[%s44 + $0x20] sm:$0xff] %v49
            %v51 = vld [vmem:[%s43 + $0x18] sm:$0xff]
            %52 = vst [vmem:[%s44 + $0x30] sm:$0xff] %v51
            %v53 = vld [vmem:[%s43 + $0x20] sm:$0xff]
            %54 = vst [vmem:[%s44 + $0x40] sm:$0xff] %v53
            %v55 = vld [vmem:[%s43 + $0x28] sm:$0xff]
            %56 = vst [vmem:[%s44 + $0x50] sm:$0xff] %v55
            %v57 = vld [vmem:[%s43 + $0x30] sm:$0xff]
            %58 = vst [vmem:[%s44 + $0x60] sm:$0xff] %v57
            %v59 = vld [vmem:[%s43 + $0x38] sm:$0xff]
            %60 = vst [vmem:[%s44 + $0x70] sm:$0xff] %v59
          $region29: #{reverse.0} parent=23 // loop_footer
            %s42 = sadd.s32 1, %s38
          $region30: #{reverse.0} parent=23 // loop_footer_branch
            %37 = sbr.rel target = $region26
          $region31: #{reverse.0} parent=23 // loop_exit
            _
        $region24: #{reverse.0} parent=8 // pred_fallthru
          _
        // Predicated region
        $region32: #{reverse.0} parent=8 // pred_check
          _
        $region33: #{reverse.0} parent=8 // pred_check_branch
          %62 = sbr.rel target = $region35
        $region34: #{reverse.0} parent=8 // pred_region
          _
        $region35: #{reverse.0} parent=8 // pred_fallthru
          _
      $region9: #{reverse.0} parent=4 // pred_fallthru
        _
      // Predicated region
      $region10: #{reverse.0} parent=4 // pred_check
        _
      $region11: #{reverse.0} parent=4 // pred_check_branch
        %8 = sbr.rel target = $region13
      $region12: #{reverse.0} parent=4 // pred_region
        %s10 = ssub.s32 256, 1
        loop: start=0, step=1, limit=1
        $region14: #{reverse.0} parent=12 // loop_pre_header
          _
        $region15: #{reverse.0} parent=12 // loop_header
          %s12 = sphi 0, %s16
          %p13 = scmp.ge.s32.totalorder %s12, 1
          %s17 = sphi %s0, %s0
          %s18 = sphi %s2, %s2
        $region16: #{reverse.0} parent=12 // loop_header_branch
          %15 = sbr.rel (%p13) target = $region20
        $region17: #{reverse.0} parent=12 // loop_body
          %v19 = vld [vmem:[%s17] sm:%s10]
          %20 = vst [vmem:[%s18] sm:%s10] %v19
          %v21 = vld [vmem:[%s17 + $0x8] sm:%s10]
          %22 = vst [vmem:[%s18 + $0x10] sm:%s10] %v21
          %v23 = vld [vmem:[%s17 + $0x10] sm:%s10]
          %24 = vst [vmem:[%s18 + $0x20] sm:%s10] %v23
          %v25 = vld [vmem:[%s17 + $0x18] sm:%s10]
          %26 = vst [vmem:[%s18 + $0x30] sm:%s10] %v25
          %v27 = vld [vmem:[%s17 + $0x20] sm:%s10]
          %28 = vst [vmem:[%s18 + $0x40] sm:%s10] %v27
          %v29 = vld [vmem:[%s17 + $0x28] sm:%s10]
          %30 = vst [vmem:[%s18 + $0x50] sm:%s10] %v29
          %v31 = vld [vmem:[%s17 + $0x30] sm:%s10]
          %32 = vst [vmem:[%s18 + $0x60] sm:%s10] %v31
          %v33 = vld [vmem:[%s17 + $0x38] sm:%s10]
          %34 = vst [vmem:[%s18 + $0x70] sm:%s10] %v33
        $region18: #{reverse.0} parent=12 // loop_footer
          %s16 = sadd.s32 1, %s12
        $region19: #{reverse.0} parent=12 // loop_footer_branch
          %11 = sbr.rel target = $region15
        $region20: #{reverse.0} parent=12 // loop_exit
          _
      $region13: #{reverse.0} parent=4 // pred_fallthru
        _
    $region5: #{reverse.0} parent=1 // pred_fallthru
      _
    %63 = vnop
    %s64 = scalar_lea.vmem [#allocation0], 7
    %v65 = vld [vmem:[%s64] ss:$-1 sm:$0xff]
    %v66 = vrot.slane %v65, 1
    %67 = vst [vmem:[#allocation1] sm:$0xff] %v66
    %s68 = scalar_lea.vmem [#allocation0], 8
    %s69 = scalar_lea.vmem %s68, 7 [#allocation0]
    %v70 = vld [vmem:[%s69] ss:$-1 sm:$0xff]
    %v71 = vrot.slane %v70, 1
    %v72 = vlaneseq
    %v73 = vshrl.u32 %v72, 7
    %vm74 = vcmp.lt.s32.totalorder %v73, 7
    %75 = vst.msk [vmem:[#allocation1] sm:$0xff] %vm74, %v71
    %s76 = scalar_lea.vmem [#allocation1], 8
    %s77 = scalar_lea.vmem [#allocation0], 16
    %s78 = scalar_lea.vmem %s77, 7 [#allocation0]
    %v79 = vld [vmem:[%s78] ss:$-1 sm:$0xff]
    %v80 = vrot.slane %v79, 1
    %81 = vst [vmem:[%s76] sm:$0xff] %v80
    %s82 = scalar_lea.vmem %s77, 8 [#allocation0]
    %s83 = scalar_lea.vmem %s82, 7 [#allocation0]
    %v84 = vld [vmem:[%s83] ss:$-1 sm:$0xff]
    %v85 = vrot.slane %v84, 1
    %v86 = vlaneseq
    %v87 = vshrl.u32 %v86, 7
    %vm88 = vcmp.lt.s32.totalorder %v87, 7
    %89 = vst.msk [vmem:[%s76] sm:$0xff] %vm88, %v85
    %s90 = scalar_lea.vmem [#allocation1], 16
    %s91 = scalar_lea.vmem [#allocation0], 32
    %s92 = scalar_lea.vmem %s91, 7 [#allocation0]
    %v93 = vld [vmem:[%s92] ss:$-1 sm:$0xff]
    %v94 = vrot.slane %v93, 1
    %95 = vst [vmem:[%s90] sm:$0xff] %v94
    %s96 = scalar_lea.vmem %s91, 8 [#allocation0]
    %s97 = scalar_lea.vmem %s96, 7 [#allocation0]
    %v98 = vld [vmem:[%s97] ss:$-1 sm:$0xff]
    %v99 = vrot.slane %v98, 1
    %v100 = vlaneseq
    %v101 = vshrl.u32 %v100, 7
    %vm102 = vcmp.lt.s32.totalorder %v101, 7
    %103 = vst.msk [vmem:[%s90] sm:$0xff] %vm102, %v99
    %s104 = scalar_lea.vmem [#allocation1], 24
    %s105 = scalar_lea.vmem [#allocation0], 48
    %s106 = scalar_lea.vmem %s105, 7 [#allocation0]
    %v107 = vld [vmem:[%s106] ss:$-1 sm:$0xff]
    %v108 = vrot.slane %v107, 1
    %109 = vst [vmem:[%s104] sm:$0xff] %v108
    %s110 = scalar_lea.vmem %s105, 8 [#allocation0]
    %s111 = scalar_lea.vmem %s110, 7 [#allocation0]
    %v112 = vld [vmem:[%s111] ss:$-1 sm:$0xff]
    %v113 = vrot.slane %v112, 1
    %v114 = vlaneseq
    %v115 = vshrl.u32 %v114, 7
    %vm116 = vcmp.lt.s32.totalorder %v115, 7
    %117 = vst.msk [vmem:[%s104] sm:$0xff] %vm116, %v113
    %s118 = scalar_lea.vmem [#allocation1], 32
    %s119 = scalar_lea.vmem [#allocation0], 64
    %s120 = scalar_lea.vmem %s119, 7 [#allocation0]
    %v121 = vld [vmem:[%s120] ss:$-1 sm:$0xff]
    %v122 = vrot.slane %v121, 1
    %123 = vst [vmem:[%s118] sm:$0xff] %v122
    %s124 = scalar_lea.vmem %s119, 8 [#allocation0]
    %s125 = scalar_lea.vmem %s124, 7 [#allocation0]
    %v126 = vld [vmem:[%s125] ss:$-1 sm:$0xff]
    %v127 = vrot.slane %v126, 1
    %v128 = vlaneseq
    %v129 = vshrl.u32 %v128, 7
    %vm130 = vcmp.lt.s32.totalorder %v129, 7
    %131 = vst.msk [vmem:[%s118] sm:$0xff] %vm130, %v127
    %s132 = scalar_lea.vmem [#allocation1], 40
    %s133 = scalar_lea.vmem [#allocation0], 80
    %s134 = scalar_lea.vmem %s133, 7 [#allocation0]
    %v135 = vld [vmem:[%s134] ss:$-1 sm:$0xff]
    %v136 = vrot.slane %v135, 1
    %137 = vst [vmem:[%s132] sm:$0xff] %v136
    %s138 = scalar_lea.vmem %s133, 8 [#allocation0]
    %s139 = scalar_lea.vmem %s138, 7 [#allocation0]
    %v140 = vld [vmem:[%s139] ss:$-1 sm:$0xff]
    %v141 = vrot.slane %v140, 1
    %v142 = vlaneseq
    %v143 = vshrl.u32 %v142, 7
    %vm144 = vcmp.lt.s32.totalorder %v143, 7
    %145 = vst.msk [vmem:[%s132] sm:$0xff] %vm144, %v141
    %s146 = scalar_lea.vmem [#allocation1], 48
    %s147 = scalar_lea.vmem [#allocation0], 96
    %s148 = scalar_lea.vmem %s147, 7 [#allocation0]
    %v149 = vld [vmem:[%s148] ss:$-1 sm:$0xff]
    %v150 = vrot.slane %v149, 1
    %151 = vst [vmem:[%s146] sm:$0xff] %v150
    %s152 = scalar_lea.vmem %s147, 8 [#allocation0]
    %s153 = scalar_lea.vmem %s152, 7 [#allocation0]
    %v154 = vld [vmem:[%s153] ss:$-1 sm:$0xff]
    %v155 = vrot.slane %v154, 1
    %v156 = vlaneseq
    %v157 = vshrl.u32 %v156, 7
    %vm158 = vcmp.lt.s32.totalorder %v157, 7
    %159 = vst.msk [vmem:[%s146] sm:$0xff] %vm158, %v155
    %s160 = scalar_lea.vmem [#allocation1], 56
    %s161 = scalar_lea.vmem [#allocation0], 112
    %s162 = scalar_lea.vmem %s161, 7 [#allocation0]
    %v163 = vld [vmem:[%s162] ss:$-1 sm:$0xff]
    %v164 = vrot.slane %v163, 1
    %165 = vst [vmem:[%s160] sm:$0xff] %v164
    %s166 = scalar_lea.vmem %s161, 8 [#allocation0]
    %s167 = scalar_lea.vmem %s166, 7 [#allocation0]
    %v168 = vld [vmem:[%s167] ss:$-1 sm:$0xff]
    %v169 = vrot.slane %v168, 1
    %v170 = vlaneseq
    %v171 = vshrl.u32 %v170, 7
    %vm172 = vcmp.lt.s32.totalorder %v171, 7
    %173 = vst.msk [vmem:[%s160] sm:$0xff] %vm172, %v169
    // Predicated region
    $region36: #{reverse.0} parent=1 // pred_check
      _
    $region37: #{reverse.0} parent=1 // pred_check_branch
      %175 = sbr.rel (0) target = $region39
    $region38: #{reverse.0} parent=1 // pred_region
      // Predicated region
      $region40: #{reverse.0} parent=38 // pred_check
        _
      $region41: #{reverse.0} parent=38 // pred_check_branch
        %177 = sbr.rel (0) target = $region43
      $region42: #{reverse.0} parent=38 // pred_region
        // Predicated region
        $region55: #{reverse.0} parent=42 // pred_check
          _
        $region56: #{reverse.0} parent=42 // pred_check_branch
          %207 = sbr.rel (0) target = $region58
        $region57: #{reverse.0} parent=42 // pred_region
          loop: start=0, step=1, limit=1
          $region59: #{reverse.0} parent=57 // loop_pre_header
            _
          $region60: #{reverse.0} parent=57 // loop_header
            %s209 = sphi 0, %s213
            %p210 = scmp.ge.s32.totalorder %s209, 1
            %s214 = sphi [#allocation1], [#allocation1]
            %s215 = sphi %s1, %s1
          $region61: #{reverse.0} parent=57 // loop_header_branch
            %212 = sbr.rel (%p210) target = $region65
          $region62: #{reverse.0} parent=57 // loop_body
            %v216 = vld [vmem:[%s214] sm:$0xff]
            %217 = vst [vmem:[%s215] sm:$0xff] %v216
            %v218 = vld [vmem:[%s214 + $0x8] sm:$0xff]
            %219 = vst [vmem:[%s215 + $0x8] sm:$0xff] %v218
            %v220 = vld [vmem:[%s214 + $0x10] sm:$0xff]
            %221 = vst [vmem:[%s215 + $0x10] sm:$0xff] %v220
            %v222 = vld [vmem:[%s214 + $0x18] sm:$0xff]
            %223 = vst [vmem:[%s215 + $0x18] sm:$0xff] %v222
            %v224 = vld [vmem:[%s214 + $0x20] sm:$0xff]
            %225 = vst [vmem:[%s215 + $0x20] sm:$0xff] %v224
            %v226 = vld [vmem:[%s214 + $0x28] sm:$0xff]
            %227 = vst [vmem:[%s215 + $0x28] sm:$0xff] %v226
            %v228 = vld [vmem:[%s214 + $0x30] sm:$0xff]
            %229 = vst [vmem:[%s215 + $0x30] sm:$0xff] %v228
            %v230 = vld [vmem:[%s214 + $0x38] sm:$0xff]
            %231 = vst [vmem:[%s215 + $0x38] sm:$0xff] %v230
          $region63: #{reverse.0} parent=57 // loop_footer
            %s213 = sadd.s32 1, %s209
          $region64: #{reverse.0} parent=57 // loop_footer_branch
            %208 = sbr.rel target = $region60
          $region65: #{reverse.0} parent=57 // loop_exit
            _
        $region58: #{reverse.0} parent=42 // pred_fallthru
          _
        // Predicated region
        $region66: #{reverse.0} parent=42 // pred_check
          _
        $region67: #{reverse.0} parent=42 // pred_check_branch
          %233 = sbr.rel target = $region69
        $region68: #{reverse.0} parent=42 // pred_region
          _
        $region69: #{reverse.0} parent=42 // pred_fallthru
          _
      $region43: #{reverse.0} parent=38 // pred_fallthru
        _
      // Predicated region
      $region44: #{reverse.0} parent=38 // pred_check
        _
      $region45: #{reverse.0} parent=38 // pred_check_branch
        %179 = sbr.rel target = $region47
      $region46: #{reverse.0} parent=38 // pred_region
        %s181 = ssub.s32 256, 1
        loop: start=0, step=1, limit=1
        $region48: #{reverse.0} parent=46 // loop_pre_header
          _
        $region49: #{reverse.0} parent=46 // loop_header
          %s183 = sphi 0, %s187
          %p184 = scmp.ge.s32.totalorder %s183, 1
          %s188 = sphi [#allocation1], [#allocation1]
          %s189 = sphi %s1, %s1
        $region50: #{reverse.0} parent=46 // loop_header_branch
          %186 = sbr.rel (%p184) target = $region54
        $region51: #{reverse.0} parent=46 // loop_body
          %v190 = vld [vmem:[%s188] sm:%s181]
          %191 = vst [vmem:[%s189] sm:%s181] %v190
          %v192 = vld [vmem:[%s188 + $0x8] sm:%s181]
          %193 = vst [vmem:[%s189 + $0x8] sm:%s181] %v192
          %v194 = vld [vmem:[%s188 + $0x10] sm:%s181]
          %195 = vst [vmem:[%s189 + $0x10] sm:%s181] %v194
          %v196 = vld [vmem:[%s188 + $0x18] sm:%s181]
          %197 = vst [vmem:[%s189 + $0x18] sm:%s181] %v196
          %v198 = vld [vmem:[%s188 + $0x20] sm:%s181]
          %199 = vst [vmem:[%s189 + $0x20] sm:%s181] %v198
          %v200 = vld [vmem:[%s188 + $0x28] sm:%s181]
          %201 = vst [vmem:[%s189 + $0x28] sm:%s181] %v200
          %v202 = vld [vmem:[%s188 + $0x30] sm:%s181]
          %203 = vst [vmem:[%s189 + $0x30] sm:%s181] %v202
          %v204 = vld [vmem:[%s188 + $0x38] sm:%s181]
          %205 = vst [vmem:[%s189 + $0x38] sm:%s181] %v204
        $region52: #{reverse.0} parent=46 // loop_footer
          %s187 = sadd.s32 1, %s183
        $region53: #{reverse.0} parent=46 // loop_footer_branch
          %182 = sbr.rel target = $region49
        $region54: #{reverse.0} parent=46 // loop_exit
          _
      $region47: #{reverse.0} parent=38 // pred_fallthru
        _
    $region39: #{reverse.0} parent=1 // pred_fallthru
      _
    %234 = vnop

</llo_original>
